<compile_context>
chip_gen: v6e
topology: v6e:2x2x1
jax: 0.10.0
libtpu: 0.0.40
codegen_flags: <defaults>
</compile_context>

<pallas_src>
import functools
import math

import jax
import jax.numpy as jnp
from jax import lax
from jax.experimental import pallas as pl
from jax.experimental.pallas import tpu as pltpu


def _round_up(x, m):
    return ((x + m - 1) // m) * m


def _pad_dim(d):
    # Lane-dense minimum is 128; past that, use 256 multiples so the 256-wide
    # v6e/v7x MXUs are fully occupied (v5e's 4x128x128 MXU is fine either way).
    return _round_up(d, 128) if d <= 128 else _round_up(d, 256)


def ffn_kernel(x_ref, w1_ref, b1_ref, w2_ref, b2_ref, o_ref, acc_ref,
               *, approximate_gelu):
    h_idx = pl.program_id(1)

    @pl.when(h_idx == 0)
    def _():
        acc_ref[...] = jnp.zeros_like(acc_ref)

    # First linear on the current hidden chunk:
    # [TM, Dp](bf16) @ [Dp, TH](bf16) -> f32 MXU accumulation.
    h = jnp.dot(x_ref[...], w1_ref[...], preferred_element_type=jnp.float32)
    h = h + b1_ref[...]                      # (1, TH) bias broadcasts over rows
    if approximate_gelu:
        # tanh-form GELU: transcendental goes to the EUP slot (frees the VALU
        # at small d_model); NOT bit-identical to torch.nn.GELU() default.
        h = jax.nn.gelu(h, approximate=True)
    else:
        # Exact (erf-based) GELU in f32, matching torch.nn.GELU() default.
        h = 0.5 * h * (1.0 + lax.erf(h * (1.0 / math.sqrt(2.0))))
    # Second linear chunk, accumulated into the resident f32 output tile.
    h = h.astype(jnp.bfloat16)
    acc_ref[...] += jnp.dot(h, w2_ref[...], preferred_element_type=jnp.float32)

    @pl.when(h_idx == pl.num_programs(1) - 1)
    def _():
        o_ref[...] = (acc_ref[...] + b2_ref[...]).astype(o_ref.dtype)


def _vmem_bytes(tm, dp, th, *, wbuf, xbuf, bw=2):
    """Rough VMEM footprint (bytes) of one kernel instance."""
    return (
        wbuf * (dp * th + th * dp) * bw      # w1 / w2 tiles (bf16)
        + wbuf * th * 4 + dp * 4             # b1 / b2 (f32)
        + xbuf * tm * dp * bw                # x tiles (bf16)
        + 2 * tm * dp * 4                    # out tiles (f32, double-buffered)
        + tm * dp * 4                        # f32 accumulator scratch
        + tm * th * (4 + bw)                 # live [TM, TH] intermediate
    )


def feed_forward(x, w1, b1, w2, b2, *, tm=1024, approximate_gelu=False,
                 out_dtype=jnp.float32, compute_dtype=jnp.bfloat16):
    """x: [B, S, D] f32; w1:[D,H], b1:[1,H], w2:[H,D], b2:[1,D]. Returns [B,S,D]."""
    B, S, D = x.shape
    H = w1.shape[1]
    M = B * S

    # Per-TensorCore VMEM budget: ~128 MiB on v5e/v6e, 64 MiB on v7x.
    try:
        vmem_cap = int(pltpu.get_tpu_info().vmem_capacity_bytes)
    except Exception:
        vmem_cap = 64 * 1024 * 1024          # assume the smallest (v7x per-TC)
    budget = min(int(0.75 * vmem_cap), 96 * 1024 * 1024)

    # --- row tile ------------------------------------------------------------
    if M <= 512:
        TM = M                                # single full-extent tile is legal
    else:
        # >= 2 row tiles so a v7x megacore has work for both TensorCores; aim
        # for tm(=1024) rows so every streamed weight byte is reused ~TM times
        # and the kernel stays MXU-bound (not HBM-bound on the weight stream).
        TM = min(tm, _round_up(pl.cdiv(M, 2), 256))

    # --- feature / hidden padding and the hidden (reduction) tile -------------
    Dp = _pad_dim(D)
    Hp = _pad_dim(H)
    th_granule = min(256, Hp)
    TH = Hp
    while TH > th_granule and _vmem_bytes(TM, Dp, TH, wbuf=2, xbuf=2) > budget:
        TH = max(th_granule, _round_up(TH // 2, th_granule))
    if M > 512:
        # Last resort when even TH == granule overflows (very large d_model).
        while _vmem_bytes(TM, Dp, TH, wbuf=2, xbuf=2) > budget and TM > 256:
            TM = max(256, TM // 2)
    Hp = _round_up(H, TH)                     # reduction blocks divide exactly

    grid_m = pl.cdiv(M, TM)
    grid_h = Hp // TH

    # --- zero-pad operands (padded rows/cols contribute exactly zero) ---------
    x2d = x.reshape(M, D)
    if Dp != D:
        x2d = jnp.pad(x2d, ((0, 0), (0, Dp - D)))
        w1 = jnp.pad(w1, ((0, Dp - D), (0, 0)))
        w2 = jnp.pad(w2, ((0, 0), (0, Dp - D)))
        b2 = jnp.pad(b2, ((0, 0), (0, Dp - D)))
    if Hp != H:
        w1 = jnp.pad(w1, ((0, 0), (0, Hp - H)))
        b1 = jnp.pad(b1, ((0, 0), (0, Hp - H)))
        w2 = jnp.pad(w2, ((0, Hp - H), (0, 0)))

    # bf16 MXU operands (f32 accumulation inside the kernel); biases stay f32.
    x2d = x2d.astype(compute_dtype)
    w1c = w1.astype(compute_dtype)
    w2c = w2.astype(compute_dtype)
    b1f = b1.astype(jnp.float32)
    b2f = b2.astype(jnp.float32)

    # Single-buffer any block whose index never changes over the grid: the
    # default depth-2 pipeline would allocate a second, useless VMEM copy.
    const_w = grid_h == 1                     # w1/b1/w2 constant over the grid
    const_x = grid_m == 1                     # x tile constant over the grid

    def spec(shape, index_map, constant):
        if constant:
            return pl.BlockSpec(shape, index_map, pipeline_mode=pl.Buffered(1))
        return pl.BlockSpec(shape, index_map)

    in_specs = [
        spec((TM, Dp), lambda i, h: (i, 0), const_x),    # x: streamed row tiles
        spec((Dp, TH), lambda i, h: (0, h), const_w),    # w1: hidden chunks
        spec((1, TH), lambda i, h: (0, h), const_w),     # b1
        spec((TH, Dp), lambda i, h: (h, 0), const_w),    # w2: hidden chunks
        spec((1, Dp), lambda i, h: (0, 0), True),        # b2: grid-constant
    ]

    footprint = _vmem_bytes(TM, Dp, TH,
                            wbuf=1 if const_w else 2,
                            xbuf=1 if const_x else 2)
    vmem_limit = int(min(budget, max(footprint + (8 << 20), 16 << 20)))

    kernel = functools.partial(ffn_kernel, approximate_gelu=approximate_gelu)

    out2d = pl.pallas_call(
        kernel,
        out_shape=jax.ShapeDtypeStruct((M, Dp), out_dtype),
        grid_spec=pltpu.PrefetchScalarGridSpec(
            num_scalar_prefetch=0,
            grid=(grid_m, grid_h),
            in_specs=in_specs,
            out_specs=pl.BlockSpec((TM, Dp), lambda i, h: (i, 0)),
            scratch_shapes=[pltpu.VMEM((TM, Dp), jnp.float32)],
        ),
        compiler_params=pltpu.CompilerParams(
            # Row tiles are independent -> sharded across TCs on v7x megacore;
            # hidden axis carries the accumulator -> must be "arbitrary" (last).
            dimension_semantics=("parallel", "arbitrary"),
            vmem_limit_bytes=vmem_limit,
        ),
    )(x2d, w1c, b1f, w2c, b2f)

    if Dp != D:
        # NOTE: for real models keep d_model a multiple of 128/256 so this
        # trailing slice (a full M*D HBM round trip) never materializes.
        out2d = out2d[:, :D]
    return out2d.reshape(B, S, D).astype(out_dtype)


def init_params(key, d_model, hidden_mult):
    """Deterministic init mimicking torch.nn.Linear (uniform +/- 1/sqrt(fan_in))."""
    hidden = hidden_mult * d_model
    k1, k2, k3, k4 = jax.random.split(key, 4)
    bound1 = 1.0 / math.sqrt(d_model)
    bound2 = 1.0 / math.sqrt(hidden)
    # Stored already transposed vs. torch ([in, out]) so the kernel does x @ W.
    w1 = jax.random.uniform(k1, (d_model, hidden), jnp.float32, -bound1, bound1)
    b1 = jax.random.uniform(k2, (1, hidden), jnp.float32, -bound1, bound1)
    w2 = jax.random.uniform(k3, (hidden, d_model), jnp.float32, -bound2, bound2)
    b2 = jax.random.uniform(k4, (1, d_model), jnp.float32, -bound2, bound2)
    return w1, b1, w2, b2


if __name__ == "__main__":
    # config: d_model=32, hidden_size_multiplier=4 -> hidden=128
    d_model = 32
    hidden_mult = 4
    batch, seq = 2, 8

    key = jax.random.PRNGKey(0)
    kx, kp = jax.random.split(key)
    x = jax.random.normal(kx, (batch, seq, d_model), dtype=jnp.float32)
    w1, b1, w2, b2 = init_params(kp, d_model, hidden_mult)

    ffn = jax.jit(feed_forward)
    out = ffn(x, w1, b1, w2, b2)
    jax.block_until_ready(out)

    # Plain-JAX f32 reference with exact (erf) GELU, matching torch.nn.GELU().
    h_ref = x.reshape(-1, d_model) @ w1 + b1
    h_ref = 0.5 * h_ref * (1.0 + lax.erf(h_ref / math.sqrt(2.0)))
    ref = (h_ref @ w2 + b2).reshape(batch, seq, d_model)
    assert out.shape == ref.shape and out.dtype == ref.dtype

    # bf16 operands + f32 accumulation: error grows ~ sqrt(K) * 2^-8, so scale
    # the tolerance with the largest contraction dim instead of hard-coding it.
    K = max(d_model, hidden_mult * d_model)
    tol = 5e-2 * max(1.0, math.sqrt(K / 128.0))
    max_err = float(jnp.max(jnp.abs(out - ref)))
    assert jnp.allclose(out, ref, atol=tol, rtol=tol), max_err

    print("KERNEL_OK")
</pallas_src>

<mosaic_0001>
module attributes {stable_mosaic.version = 11 : i64} {
  func.func @ffn_kernel(%arg0: i32, %arg1: i32, %arg2: memref<16x128xbf16, #tpu.memory_space<vmem>>, %arg3: memref<128x128xbf16, #tpu.memory_space<vmem>>, %arg4: memref<1x128xf32, #tpu.memory_space<vmem>>, %arg5: memref<128x128xbf16, #tpu.memory_space<vmem>>, %arg6: memref<1x128xf32, #tpu.memory_space<vmem>>, %arg7: memref<16x128xf32, #tpu.memory_space<vmem>>, %arg8: memref<16x128xf32, #tpu.memory_space<vmem>>) attributes {dimension_semantics = [#tpu.dimension_semantics<parallel>, #tpu.dimension_semantics<arbitrary>], iteration_bounds = array<i64: 1, 1>, scalar_prefetch = 0 : i64, scratch_operands = 1 : i64, tpu.core_type = #tpu.core_type<tc>, window_params = [{pipeline_mode = #tpu.pipeline_mode<synchronous>, transform_indices = @transform_0, window_bounds = array<i64: 16, 128>}, {pipeline_mode = #tpu.pipeline_mode<synchronous>, transform_indices = @transform_1, window_bounds = array<i64: 128, 128>}, {pipeline_mode = #tpu.pipeline_mode<synchronous>, transform_indices = @transform_2, window_bounds = array<i64: 1, 128>}, {pipeline_mode = #tpu.pipeline_mode<synchronous>, transform_indices = @transform_3, window_bounds = array<i64: 128, 128>}, {pipeline_mode = #tpu.pipeline_mode<synchronous>, transform_indices = @transform_4, window_bounds = array<i64: 1, 128>}, {transform_indices = @transform_5, window_bounds = array<i64: 16, 128>}]} {
    %c0_i32 = arith.constant 0 : i32
    %0 = arith.cmpi eq, %arg1, %c0_i32 : i32
    %1 = arith.extui %0 : i1 to i32
    %c0_i32_0 = arith.constant 0 : i32
    %2 = arith.cmpi ne, %1, %c0_i32_0 : i32
    scf.if %2 {
      %cst_18 = arith.constant 0.000000e+00 : f32
      %26 = vector.broadcast %cst_18 : f32 to vector<16x128xf32>
      %c0_19 = arith.constant 0 : index
      %c0_20 = arith.constant 0 : index
      %27 = vector.load %arg8[%c0_19, %c0_20] : memref<16x128xf32, #tpu.memory_space<vmem>>, vector<16x128xf32>
      tpu.vector_store %arg8[%c0_19, %c0_20], %26 {strides = array<i32>} : memref<16x128xf32, #tpu.memory_space<vmem>>, vector<16x128xf32>,
    } else {
    }
    %c0 = arith.constant 0 : index
    %c0_1 = arith.constant 0 : index
    %3 = vector.load %arg2[%c0, %c0_1] : memref<16x128xbf16, #tpu.memory_space<vmem>>, vector<16x128xbf16>
    %c0_2 = arith.constant 0 : index
    %c0_3 = arith.constant 0 : index
    %4 = vector.load %arg3[%c0_2, %c0_3] : memref<128x128xbf16, #tpu.memory_space<vmem>>, vector<128x128xbf16>
    %cst = arith.constant dense<0.000000e+00> : vector<16x128xf32>
    %5 = tpu.matmul %3, %4, %cst {dimension_numbers = #tpu.dot_dimension_numbers<[1], [0], [0], [1], [0, 0, 1, 1], [], []>} : vector<16x128xbf16>, vector<128x128xbf16>, vector<16x128xf32> -> vector<16x128xf32>
    %c0_4 = arith.constant 0 : index
    %c0_5 = arith.constant 0 : index
    %6 = vector.load %arg4[%c0_4, %c0_5] : memref<1x128xf32, #tpu.memory_space<vmem>>, vector<1x128xf32>
    %7 = vector.broadcast %6 : vector<1x128xf32> to vector<16x128xf32>
    %8 = arith.addf %5, %7 : vector<16x128xf32>
    %cst_6 = arith.constant 5.000000e-01 : f32
    %9 = vector.broadcast %cst_6 : f32 to vector<16x128xf32>
    %10 = arith.mulf %9, %8 : vector<16x128xf32>
    %cst_7 = arith.constant 0.707106769 : f32
    %11 = vector.broadcast %cst_7 : f32 to vector<16x128xf32>
    %12 = arith.mulf %8, %11 : vector<16x128xf32>
    %13 = math.erf %12 : vector<16x128xf32>
    %cst_8 = arith.constant 1.000000e+00 : f32
    %14 = vector.broadcast %cst_8 : f32 to vector<16x128xf32>
    %15 = arith.addf %14, %13 : vector<16x128xf32>
    %16 = arith.mulf %10, %15 : vector<16x128xf32>
    %17 = arith.truncf %16 : vector<16x128xf32> to vector<16x128xbf16>
    %c0_9 = arith.constant 0 : index
    %c0_10 = arith.constant 0 : index
    %18 = vector.load %arg8[%c0_9, %c0_10] : memref<16x128xf32, #tpu.memory_space<vmem>>, vector<16x128xf32>
    %c0_11 = arith.constant 0 : index
    %c0_12 = arith.constant 0 : index
    %19 = vector.load %arg5[%c0_11, %c0_12] : memref<128x128xbf16, #tpu.memory_space<vmem>>, vector<128x128xbf16>
    %cst_13 = arith.constant dense<0.000000e+00> : vector<16x128xf32>
    %20 = tpu.matmul %17, %19, %cst_13 {dimension_numbers = #tpu.dot_dimension_numbers<[1], [0], [0], [1], [0, 0, 1, 1], [], []>} : vector<16x128xbf16>, vector<128x128xbf16>, vector<16x128xf32> -> vector<16x128xf32>
    %21 = arith.addf %18, %20 : vector<16x128xf32>
    %c0_14 = arith.constant 0 : index
    %c0_15 = arith.constant 0 : index
    %22 = vector.load %arg8[%c0_14, %c0_15] : memref<16x128xf32, #tpu.memory_space<vmem>>, vector<16x128xf32>
    tpu.vector_store %arg8[%c0_14, %c0_15], %21 {strides = array<i32>} : memref<16x128xf32, #tpu.memory_space<vmem>>, vector<16x128xf32>,
    %c0_i32_16 = arith.constant 0 : i32
    %23 = arith.cmpi eq, %arg1, %c0_i32_16 : i32
    %24 = arith.extui %23 : i1 to i32
    %c0_i32_17 = arith.constant 0 : i32
    %25 = arith.cmpi ne, %24, %c0_i32_17 : i32
    scf.if %25 {
      %c0_18 = arith.constant 0 : index
      %c0_19 = arith.constant 0 : index
      %26 = vector.load %arg8[%c0_18, %c0_19] : memref<16x128xf32, #tpu.memory_space<vmem>>, vector<16x128xf32>
      %c0_20 = arith.constant 0 : index
      %c0_21 = arith.constant 0 : index
      %27 = vector.load %arg6[%c0_20, %c0_21] : memref<1x128xf32, #tpu.memory_space<vmem>>, vector<1x128xf32>
      %28 = vector.broadcast %27 : vector<1x128xf32> to vector<16x128xf32>
      %29 = arith.addf %26, %28 : vector<16x128xf32>
      %c0_22 = arith.constant 0 : index
      %c0_23 = arith.constant 0 : index
      %30 = vector.load %arg7[%c0_22, %c0_23] : memref<16x128xf32, #tpu.memory_space<vmem>>, vector<16x128xf32>
      tpu.vector_store %arg7[%c0_22, %c0_23], %29 {strides = array<i32>} : memref<16x128xf32, #tpu.memory_space<vmem>>, vector<16x128xf32>,
    } else {
    }
    return
  }
  func.func @transform_0(%arg0: i32, %arg1: i32) -> (i32, i32) {
    %c0_i32 = arith.constant 0 : i32
    %c0_i32_0 = arith.constant 0 : i32
    return %arg0, %c0_i32 : i32, i32
  }
  func.func @transform_1(%arg0: i32, %arg1: i32) -> (i32, i32) {
    %c0_i32 = arith.constant 0 : i32
    %c0_i32_0 = arith.constant 0 : i32
    return %c0_i32, %arg1 : i32, i32
  }
  func.func @transform_2(%arg0: i32, %arg1: i32) -> (i32, i32) {
    %c0_i32 = arith.constant 0 : i32
    %c0_i32_0 = arith.constant 0 : i32
    return %c0_i32, %arg1 : i32, i32
  }
  func.func @transform_3(%arg0: i32, %arg1: i32) -> (i32, i32) {
    %c0_i32 = arith.constant 0 : i32
    %c0_i32_0 = arith.constant 0 : i32
    return %arg1, %c0_i32 : i32, i32
  }
  func.func @transform_4(%arg0: i32, %arg1: i32) -> (i32, i32) {
    %c0_i32 = arith.constant 0 : i32
    %c0_i32_0 = arith.constant 0 : i32
    %c0_i32_1 = arith.constant 0 : i32
    return %c0_i32, %c0_i32_0 : i32, i32
  }
  func.func @transform_5(%arg0: i32, %arg1: i32) -> (i32, i32) {
    %c0_i32 = arith.constant 0 : i32
    %c0_i32_0 = arith.constant 0 : i32
    return %arg0, %c0_i32 : i32, i32
  }
}

</mosaic_0001>

<llo_original>
// kernel: feed_forward.1
$region0: #{feed_forward.1}
  #allocation0 [shape = 'u32[]', space=smem, size = 0x4, offset = 0x4, fixed_abs, tag = 'smem constant byte address 0x4 - core index']
  #allocation1 [shape = 'u32[144,128]{1,0:T(1,128)}', space=vmem, size = 0x12000, scoped, tag = 'internal scratch']
  #allocation2 [shape = 'f32[16,128]{1,0:T(8,128)}', space=vmem, size = 0x2000, scoped, tag = 'scratch operand']
  %s0 = inlined_call_operand.vmem [shape: bf16[16,128], index: 0, kind: input, shape index: {}]
  %s1 = inlined_call_operand.vmem [shape: bf16[128,128], index: 1, kind: input, shape index: {}]
  %s2 = inlined_call_operand.vmem [shape: f32[1,128], index: 2, kind: input, shape index: {}]
  %s3 = inlined_call_operand.vmem [shape: bf16[128,128], index: 3, kind: input, shape index: {}]
  %s4 = inlined_call_operand.vmem [shape: f32[1,128], index: 4, kind: input, shape index: {}]
  %s5 = inlined_call_operand.vmem [shape: f32[16,128], index: 5, kind: output, shape index: {}]
  %s6 = sld [smem:[#allocation0]]
  $region38: #{feed_forward.1} parent=0
    _
  %s8 = ssub.s32 1, %s6
  %s9 = scalar_select 0, %s8, %s6
  // Predicated region
  $region2: #{feed_forward.1} parent=0 // pred_check
    _
  $region3: #{feed_forward.1} parent=0 // pred_check_branch
    %11 = sbr.rel (0) target = $region5
  $region4: #{feed_forward.1} parent=0 // pred_region
    _
  $region5: #{feed_forward.1} parent=0 // pred_fallthru
    _
  // Predicated region
  $region6: #{feed_forward.1} parent=0 // pred_check
    _
  $region7: #{feed_forward.1} parent=0 // pred_check_branch
    %13 = sbr.rel (0) target = $region9
  $region8: #{feed_forward.1} parent=0 // pred_region
    _
  $region9: #{feed_forward.1} parent=0 // pred_fallthru
    _
  // Predicated region
  $region10: #{feed_forward.1} parent=0 // pred_check
    _
  $region11: #{feed_forward.1} parent=0 // pred_check_branch
    %15 = sbr.rel (0) target = $region13
  $region12: #{feed_forward.1} parent=0 // pred_region
    _
  $region13: #{feed_forward.1} parent=0 // pred_fallthru
    _
  // Predicated region
  $region14: #{feed_forward.1} parent=0 // pred_check
    _
  $region15: #{feed_forward.1} parent=0 // pred_check_branch
    %17 = sbr.rel (0) target = $region17
  $region16: #{feed_forward.1} parent=0 // pred_region
    _
  $region17: #{feed_forward.1} parent=0 // pred_fallthru
    _
  // Predicated region
  $region18: #{feed_forward.1} parent=0 // pred_check
    _
  $region19: #{feed_forward.1} parent=0 // pred_check_branch
    %19 = sbr.rel (0) target = $region21
  $region20: #{feed_forward.1} parent=0 // pred_region
    _
  $region21: #{feed_forward.1} parent=0 // pred_fallthru
    _
  %p21 = scmp.eq.s32.totalorder 0, 0
  // Predicated region
  $region22: #{feed_forward.1} parent=0 // pred_check
    %p22 = pneg %p21
  $region23: #{feed_forward.1} parent=0 // pred_check_branch
    %24 = sbr.rel (%p22) target = $region25
  $region24: #{feed_forward.1} parent=0 // pred_region
    %25 = vst [vmem:[#allocation2] sm:$0xff] 0.0
    %26 = vst [vmem:[#allocation2 + $0x8] sm:$0xff] 0.0
  $region25: #{feed_forward.1} parent=0 // pred_fallthru
    _
  %v27 = vld [vmem:[%s0] sm:$0xf]
  %v28 = vld [vmem:[%s0 + $0x4] sm:$0xf]
  %v29 = vld [vmem:[%s1] sm:$0xf]
  %v30 = vld [vmem:[%s1 + $0x4] sm:$0xf]
  %v31 = vld [vmem:[%s1 + $0x8] sm:$0xf]
  %v32 = vld [vmem:[%s1 + $0xc] sm:$0xf]
  %v33 = vld [vmem:[%s1 + $0x10] sm:$0xf]
  %v34 = vld [vmem:[%s1 + $0x14] sm:$0xf]
  %v35 = vld [vmem:[%s1 + $0x18] sm:$0xf]
  %v36 = vld [vmem:[%s1 + $0x1c] sm:$0xf]
  %v37 = vld [vmem:[%s1 + $0x20] sm:$0xf]
  %v38 = vld [vmem:[%s1 + $0x24] sm:$0xf]
  %v39 = vld [vmem:[%s1 + $0x28] sm:$0xf]
  %v40 = vld [vmem:[%s1 + $0x2c] sm:$0xf]
  %v41 = vld [vmem:[%s1 + $0x30] sm:$0xf]
  %v42 = vld [vmem:[%s1 + $0x34] sm:$0xf]
  %v43 = vld [vmem:[%s1 + $0x38] sm:$0xf]
  %v44 = vld [vmem:[%s1 + $0x3c] sm:$0xf]
  %v45 = vld [vmem:[%s2] sm:$0x1]
  %v47 = vlaneseq
  %v48 = vshrl.u32 %v47, 7
  %v49 = vsub.s32 0, %v48
  %v50 = vrot.slane %v45, %v49
  %v54 = vunpack.c.l.b16 %v27
  %v55 = vunpack.c.l.b16 %v28
  %v56 = vpack.c.b16 %v55, %v54
  %v74 = vunpack.c.l.b16 %v29
  %v75 = vunpack.c.l.b16 %v30
  %v76 = vunpack.c.l.b16 %v31
  %v77 = vunpack.c.l.b16 %v32
  %v78 = vunpack.c.l.b16 %v33
  %v79 = vunpack.c.l.b16 %v34
  %v80 = vunpack.c.l.b16 %v35
  %v81 = vunpack.c.l.b16 %v36
  %v82 = vunpack.c.l.b16 %v37
  %v83 = vunpack.c.l.b16 %v38
  %v84 = vunpack.c.l.b16 %v39
  %v85 = vunpack.c.l.b16 %v40
  %v86 = vunpack.c.l.b16 %v41
  %v87 = vunpack.c.l.b16 %v42
  %v88 = vunpack.c.l.b16 %v43
  %v89 = vunpack.c.l.b16 %v44
  %v90 = vpack.c.b16 %v75, %v74
  %v91 = vpack.c.b16 %v77, %v76
  %v92 = vpack.c.b16 %v79, %v78
  %v93 = vpack.c.b16 %v81, %v80
  %v94 = vpack.c.b16 %v83, %v82
  %v95 = vpack.c.b16 %v85, %v84
  %v96 = vpack.c.b16 %v87, %v86
  %v97 = vpack.c.b16 %v89, %v88
  %106 = vmatprep.subr.bf16.mxu0 0
  %107 = vmatpush1.bf16.msra.mxu0 %v97
  %108 = vmatprep.subr.bf16.mxu0 0
  %109 = vmatpush1.bf16.msra.mxu0 %v96
  %110 = vmatprep.subr.bf16.mxu0 0
  %111 = vmatpush1.bf16.msra.mxu0 %v95
  %112 = vmatprep.subr.bf16.mxu0 0
  %113 = vmatpush1.bf16.msra.mxu0 %v94
  %114 = vmatprep.subr.bf16.mxu0 0
  %115 = vmatpush1.bf16.msra.mxu0 %v93
  %116 = vmatprep.subr.bf16.mxu0 0
  %117 = vmatpush1.bf16.msra.mxu0 %v92
  %118 = vmatprep.subr.bf16.mxu0 0
  %119 = vmatpush1.bf16.msra.mxu0 %v91
  %120 = vmatprep.subr.bf16.mxu0 0
  %121 = vmatpush1.bf16.msra.mxu0 %v90
  %122 = vmatprep.subr.bf16.mxu0 0
  %123 = vmatpush2.bf16.msra.mxu0 0
  %124 = vmatprep.subr.bf16.mxu0 0
  %125 = vmatpush2.bf16.msra.mxu0 0
  %126 = vmatprep.subr.bf16.mxu0 0
  %127 = vmatpush2.bf16.msra.mxu0 0
  %128 = vmatprep.subr.bf16.mxu0 0
  %129 = vmatpush2.bf16.msra.mxu0 0
  %130 = vmatprep.subr.bf16.mxu0 0
  %131 = vmatpush2.bf16.msra.mxu0 0
  %132 = vmatprep.subr.bf16.mxu0 0
  %133 = vmatpush2.bf16.msra.mxu0 0
  %134 = vmatprep.subr.bf16.mxu0 0
  %135 = vmatpush2.bf16.msra.mxu0 0
  %136 = vmatprep.subr.bf16.mxu0 0
  %137 = vmatpush2.bf16.msra.mxu0 0
  %138 = vmatprep.mubr.bf16.mxu0 0
  %139 = vmatmul.mubr.bf16.gmra.mxu0 %v56
  %v140 = vpop.f32.mrf.mxu0
  %v141 = vadd.f32 %v50, %v140
  %v142 = vpop.f32.mrf.mxu0
  %v143 = vpop.f32.mrf.mxu0
  %v144 = vadd.f32 %v50, %v143
  %v145 = vpop.f32.mrf.mxu0
  %146 = vdwg.mxu0
  %v147 = vmul.f32 %v141, 0.5
  %v148 = vmul.f32 %v144, 0.5
  %v149 = vmul.f32 %v141, 0.70710677
  %v150 = vmul.f32 %v144, 0.70710677
  %v151 = verf.f32.pop %v149
  %v152 = verf.f32.pop %v150
  %v153 = vadd.f32 %v151, 1.0
  %v154 = vadd.f32 %v152, 1.0
  %v155 = vmul.f32 %v147, %v153
  %v156 = vmul.f32 %v148, %v154
  %v157 = vpack.c.bf16 %v156, %v155
  %v158 = vld [vmem:[#allocation2] sm:$0xff]
  %v159 = vld [vmem:[#allocation2 + $0x8] sm:$0xff]
  %v160 = vld [vmem:[%s3] sm:$0xf]
  %v161 = vld [vmem:[%s3 + $0x4] sm:$0xf]
  %v162 = vld [vmem:[%s3 + $0x8] sm:$0xf]
  %v163 = vld [vmem:[%s3 + $0xc] sm:$0xf]
  %v164 = vld [vmem:[%s3 + $0x10] sm:$0xf]
  %v165 = vld [vmem:[%s3 + $0x14] sm:$0xf]
  %v166 = vld [vmem:[%s3 + $0x18] sm:$0xf]
  %v167 = vld [vmem:[%s3 + $0x1c] sm:$0xf]
  %v168 = vld [vmem:[%s3 + $0x20] sm:$0xf]
  %v169 = vld [vmem:[%s3 + $0x24] sm:$0xf]
  %v170 = vld [vmem:[%s3 + $0x28] sm:$0xf]
  %v171 = vld [vmem:[%s3 + $0x2c] sm:$0xf]
  %v172 = vld [vmem:[%s3 + $0x30] sm:$0xf]
  %v173 = vld [vmem:[%s3 + $0x34] sm:$0xf]
  %v174 = vld [vmem:[%s3 + $0x38] sm:$0xf]
  %v175 = vld [vmem:[%s3 + $0x3c] sm:$0xf]
  %v192 = vunpack.c.l.b16 %v160
  %v193 = vunpack.c.l.b16 %v161
  %v194 = vunpack.c.l.b16 %v162
  %v195 = vunpack.c.l.b16 %v163
  %v196 = vunpack.c.l.b16 %v164
  %v197 = vunpack.c.l.b16 %v165
  %v198 = vunpack.c.l.b16 %v166
  %v199 = vunpack.c.l.b16 %v167
  %v200 = vunpack.c.l.b16 %v168
  %v201 = vunpack.c.l.b16 %v169
  %v202 = vunpack.c.l.b16 %v170
  %v203 = vunpack.c.l.b16 %v171
  %v204 = vunpack.c.l.b16 %v172
  %v205 = vunpack.c.l.b16 %v173
  %v206 = vunpack.c.l.b16 %v174
  %v207 = vunpack.c.l.b16 %v175
  %v208 = vpack.c.b16 %v193, %v192
  %v209 = vpack.c.b16 %v195, %v194
  %v210 = vpack.c.b16 %v197, %v196
  %v211 = vpack.c.b16 %v199, %v198
  %v212 = vpack.c.b16 %v201, %v200
  %v213 = vpack.c.b16 %v203, %v202
  %v214 = vpack.c.b16 %v205, %v204
  %v215 = vpack.c.b16 %v207, %v206
  %224 = vmatprep.subr.bf16.mxu0 0
  %225 = vmatpush1.bf16.msra.mxu0 %v215
  %226 = vmatprep.subr.bf16.mxu0 0
  %227 = vmatpush1.bf16.msra.mxu0 %v214
  %228 = vmatprep.subr.bf16.mxu0 0
  %229 = vmatpush1.bf16.msra.mxu0 %v213
  %230 = vmatprep.subr.bf16.mxu0 0
  %231 = vmatpush1.bf16.msra.mxu0 %v212
  %232 = vmatprep.subr.bf16.mxu0 0
  %233 = vmatpush1.bf16.msra.mxu0 %v211
  %234 = vmatprep.subr.bf16.mxu0 0
  %235 = vmatpush1.bf16.msra.mxu0 %v210
  %236 = vmatprep.subr.bf16.mxu0 0
  %237 = vmatpush1.bf16.msra.mxu0 %v209
  %238 = vmatprep.subr.bf16.mxu0 0
  %239 = vmatpush1.bf16.msra.mxu0 %v208
  %240 = vmatprep.subr.bf16.mxu0 0
  %241 = vmatpush2.bf16.msra.mxu0 0
  %242 = vmatprep.subr.bf16.mxu0 0
  %243 = vmatpush2.bf16.msra.mxu0 0
  %244 = vmatprep.subr.bf16.mxu0 0
  %245 = vmatpush2.bf16.msra.mxu0 0
  %246 = vmatprep.subr.bf16.mxu0 0
  %247 = vmatpush2.bf16.msra.mxu0 0
  %248 = vmatprep.subr.bf16.mxu0 0
  %249 = vmatpush2.bf16.msra.mxu0 0
  %250 = vmatprep.subr.bf16.mxu0 0
  %251 = vmatpush2.bf16.msra.mxu0 0
  %252 = vmatprep.subr.bf16.mxu0 0
  %253 = vmatpush2.bf16.msra.mxu0 0
  %254 = vmatprep.subr.bf16.mxu0 0
  %255 = vmatpush2.bf16.msra.mxu0 0
  %256 = vmatprep.mubr.bf16.mxu0 0
  %257 = vmatmul.mubr.bf16.gmra.mxu0 %v157
  %v258 = vpop.f32.mrf.mxu0
  %v259 = vadd.f32 0.0, %v258
  %v260 = vpop.f32.mrf.mxu0
  %v261 = vpop.f32.mrf.mxu0
  %v262 = vadd.f32 0.0, %v261
  %v263 = vpop.f32.mrf.mxu0
  %264 = vdwg.mxu0
  %v265 = vadd.f32 %v158, %v259
  %v266 = vadd.f32 %v159, %v262
  %267 = vst [vmem:[#allocation2] sm:$0xff] %v265
  %268 = vst [vmem:[#allocation2 + $0x8] sm:$0xff] %v266
  // Predicated region
  $region26: #{feed_forward.1} parent=0 // pred_check
    %p269 = pneg %p21
  $region27: #{feed_forward.1} parent=0 // pred_check_branch
    %271 = sbr.rel (%p269) target = $region29
  $region28: #{feed_forward.1} parent=0 // pred_region
    %v272 = vld [vmem:[#allocation2] sm:$0xff]
    %v273 = vld [vmem:[#allocation2 + $0x8] sm:$0xff]
    %v274 = vld [vmem:[%s4] sm:$0x1]
    %v276 = vlaneseq
    %v277 = vshrl.u32 %v276, 7
    %v278 = vsub.s32 0, %v277
    %v279 = vrot.slane %v274, %v278
    %v281 = vadd.f32 %v272, %v279
    %v282 = vadd.f32 %v273, %v279
    %283 = vst [vmem:[%s5] sm:$0xff] %v281
    %284 = vst [vmem:[%s5 + $0x8] sm:$0xff] %v282
  $region29: #{feed_forward.1} parent=0 // pred_fallthru
    _
  // Predicated region
  $region30: #{feed_forward.1} parent=0 // pred_check
    _
  $region31: #{feed_forward.1} parent=0 // pred_check_branch
    %286 = sbr.rel (0) target = $region33
  $region32: #{feed_forward.1} parent=0 // pred_region
    _
  $region33: #{feed_forward.1} parent=0 // pred_fallthru
    _
  // Predicated region
  $region34: #{feed_forward.1} parent=0 // pred_check
    _
  $region35: #{feed_forward.1} parent=0 // pred_check_branch
    %288 = sbr.rel (0) target = $region37
  $region36: #{feed_forward.1} parent=0 // pred_region
    _
  $region37: #{feed_forward.1} parent=0 // pred_fallthru
    _

</llo_original>
